<compile_context>
chip_gen: v7x
topology: tpu7x:2x2x1
jax: 0.10.0
libtpu: 0.0.40
codegen_flags: <defaults>
</compile_context>

<pallas_src>
import jax
import jax.numpy as jnp
from jax.experimental import pallas as pl
from jax.experimental.pallas import tpu as pltpu

_ANCHOR_TILE = (8, 128)  # one full f32 vreg: sublane/lane dense, unmasked vst


def _anchor_kernel(x_hbm_ref, o_ref):
    # Empty.forward uses none of x's values: x_hbm_ref is a raw HBM ref
    # (memory_space=pl.ANY) that is deliberately never read, so no DMA of x is
    # ever issued.  Write a single zero tile so the op has an on-device anchor.
    del x_hbm_ref
    o_ref[...] = jnp.zeros_like(o_ref)


def empty_forward(x):
    """JAX/Pallas equivalent of Empty.forward(x)."""
    # Fixed ~4 KiB Pallas anchor; cost is independent of x's size.  Its output
    # is intentionally unused (exactly like x's data in the reference module);
    # has_side_effects prevents DCE under jit without any host sync.
    pl.pallas_call(
        _anchor_kernel,
        out_shape=jax.ShapeDtypeStruct(_ANCHOR_TILE, jnp.float32),
        grid=(1,),
        in_specs=[pl.BlockSpec(memory_space=pl.ANY)],
        out_specs=pl.BlockSpec(_ANCHOR_TILE, lambda i: (0, 0)),
        compiler_params=pltpu.CompilerParams(has_side_effects=True),
    )(x)

    # TODO(synk): a zero-width (last dim = 0) output has no Pallas equivalent
    # (VMEM blocks need non-zero lane extents), so the zero-element result is
    # built with jnp.empty.  dtype float32 matches torch's default dtype.
    out = jnp.empty(x.shape[:-1] + (0,), dtype=jnp.float32)

    # Match `.to(x.device)`: place the zero-element result with x's sharding.
    sharding = getattr(x, "sharding", None)
    if sharding is not None:
        out = jax.device_put(out, sharding)
    return out


if __name__ == "__main__":
    key = jax.random.PRNGKey(0)
    # Any (..., d) input works; the forward depends only on x.shape[:-1].
    x = jax.random.normal(key, (2, 4, 16, 16), dtype=jnp.float32)

    out = empty_forward(x)
    out = jax.block_until_ready(out)

    assert out.shape == (2, 4, 16, 0), out.shape
    assert out.dtype == jnp.float32
    assert out.size == 0

    print("KERNEL_OK")
</pallas_src>

<mosaic_0001>
module attributes {stable_mosaic.version = 11 : i64} {
  func.func @_anchor_kernel(%arg0: i32, %arg1: memref<2x4x16x16xf32, #tpu.memory_space<any>>, %arg2: memref<8x128xf32, #tpu.memory_space<vmem>>) attributes {dimension_semantics = [#tpu.dimension_semantics<arbitrary>], iteration_bounds = array<i64: 1>, scalar_prefetch = 0 : i64, scratch_operands = 0 : i64, tpu.core_type = #tpu.core_type<tc>, window_params = [{}, {pipeline_mode = #tpu.pipeline_mode<synchronous>, transform_indices = @transform_1, window_bounds = array<i64: 8, 128>}]} {
    %cst = arith.constant 0.000000e+00 : f32
    %0 = vector.broadcast %cst : f32 to vector<8x128xf32>
    %c0 = arith.constant 0 : index
    %c0_0 = arith.constant 0 : index
    %1 = vector.load %arg2[%c0, %c0_0] : memref<8x128xf32, #tpu.memory_space<vmem>>, vector<8x128xf32>
    tpu.vector_store %arg2[%c0, %c0_0], %0 {strides = array<i32>} : memref<8x128xf32, #tpu.memory_space<vmem>>, vector<8x128xf32>,
    return
  }
  func.func @transform_1(%arg0: i32) -> (i32, i32) {
    %c0_i32 = arith.constant 0 : i32
    %c0_i32_0 = arith.constant 0 : i32
    %c0_i32_1 = arith.constant 0 : i32
    return %c0_i32, %c0_i32_0 : i32, i32
  }
}

</mosaic_0001>

<llo_original>
// kernel: tpu_custom_call.1
$region0: #{tpu_custom_call.1}
  #allocation0 [shape = 'u32[]', space=smem, size = 0x4, offset = 0x4, fixed_abs, tag = 'smem constant byte address 0x4 - core index']
  #allocation1 [shape = 'u32[144,128]{1,0:T(1,128)}', space=vmem, size = 0x12000, scoped, tag = 'internal scratch']
  %s0 = inlined_call_operand.hbm [shape: f32[2,4,16,16], index: 0, kind: input, shape index: {}]
  %s1 = inlined_call_operand.hbm [shape: f32[8,128], index: 1, kind: output, shape index: {}]
  %s2 = sld [smem:[#allocation0]]
  $region10: #{tpu_custom_call.1} parent=0
    _
  %s4 = ssub.s32 1, %s2
  %s5 = scalar_select 0, %s4, %s2
  $region1: #{tpu_custom_call.1} parent=0
    #allocation2 [shape = 'u8[4096]{0}', space=vmem, size = 0x1000, scoped, tag = 'output window, operand 0, single buffered']
    #allocation3 [shape = 's32[1]{0}', space=sflag, size = 0x4, scoped, tag = 'scoped memory for tpu_custom_call.1']
    %6 = vsyncpa [#allocation3], 0
    %7 = vst [vmem:[#allocation2] sm:$0xff] 0.0
    // Predicated region
    $region2: #{tpu_custom_call.1} parent=1 // pred_check
      _
    $region3: #{tpu_custom_call.1} parent=1 // pred_check_branch
      %9 = sbr.rel (0) target = $region5
    $region4: #{tpu_custom_call.1} parent=1 // pred_region
      %s11 = ssub.s32 128, 128
      %12 = vsyncadd [#allocation3], %s11
      %s14 = sshll.u32 [#allocation2], 4
      %s15 = int_to_ptr.vmem [resolvable:$true] %s14
      %17 = dma.vmem_to_hbm [thread:$0]  %s15, 128, %s1, [#allocation3]
    $region5: #{tpu_custom_call.1} parent=1 // pred_fallthru
      _
    // Predicated region
    $region6: #{tpu_custom_call.1} parent=1 // pred_check
      _
    $region7: #{tpu_custom_call.1} parent=1 // pred_check_branch
      %19 = sbr.rel (0) target = $region9
    $region8: #{tpu_custom_call.1} parent=1 // pred_region
      %20 = dma.done [#allocation3], 128
    $region9: #{tpu_custom_call.1} parent=1 // pred_fallthru
      _
    %21 = vsyncpa [#allocation3], 1

</llo_original>
